<compile_context>
chip_gen: v6e
topology: v6e:2x2x1
jax: 0.10.0
libtpu: 0.0.40
codegen_flags: <defaults>
</compile_context>

<pallas_src>
import jax
import jax.numpy as jnp
from jax import lax
from jax.experimental import pallas as pl
from jax.experimental.pallas import tpu as pltpu


_LANE = 128


def _round_up(x, m):
    return (x + m - 1) // m * m


def _cdiv(a, b):
    return (a + b - 1) // b


def _vmem_capacity_bytes():
    try:
        return int(pltpu.get_tpu_info().vmem_capacity_bytes)
    except Exception:
        return 64 * 1024 * 1024        # conservative: v7x per-TensorCore VMEM


def _onehot_gather_kernel(idx_ref, table_ref, out_ref):
    """idx_ref:   VMEM (TILE, 1) int32 row ids (already offset-shifted)
       table_ref: VMEM (V_pad, D_pad) resident embedding table (untiled input)
       out_ref:   VMEM (TILE, D_pad) output slab for this grid step."""
    tile = out_ref.shape[0]
    v_pad = table_ref.shape[0]
    idx = idx_ref[...]                                            # (TILE, 1) int32
    table = table_ref[...]                                        # (V_pad, D_pad)
    iota = lax.broadcasted_iota(jnp.int32, (tile, v_pad), 1)      # (TILE, V_pad)
    # One-hot rows are exactly 0/1 in any float dtype; cheap VPU compare/select
    # that co-issues with the MXU push.  Accumulation is f32 on the MXU.
    onehot = jnp.where(idx == iota, 1.0, 0.0).astype(table.dtype)
    out = jnp.dot(onehot, table, preferred_element_type=jnp.float32)
    out_ref[...] = out.astype(out_ref.dtype)


def _take_gather_kernel(idx_ref, table_ref, out_ref):
    """Large-vocab path: vectorized gather from the VMEM-resident table."""
    # TODO(synk): for tables that do not fit VMEM, replace with an HBM-resident
    # table (memory_space=pl.ANY) and a manual multi-DMA row gather.
    tile = out_ref.shape[0]
    idx = idx_ref[...].reshape(tile)                              # (TILE,) int32
    out_ref[...] = jnp.take(table_ref[...], idx, axis=0).astype(out_ref.dtype)


def features_embedding(x_idx, offsets, emb_table, *, tile_rows=512,
                       onehot_max_vocab=2048):
    """x_idx: (B, F) int32 field-local indices
       offsets: (F,) int32 exclusive-cumsum field offsets
       emb_table: (V, D) float, V = sum(field_dims)
       -> (B, F, D)"""
    B, F = x_idx.shape
    V, D = emb_table.shape
    N = B * F

    # Offset shift + flatten outside the kernel; clamp guards the gather paths
    # against out-of-range indices (there is no runtime bounds check in VMEM).
    flat_idx = (x_idx.astype(jnp.int32) + offsets[None, :].astype(jnp.int32)).reshape(N)
    flat_idx = jnp.clip(flat_idx, 0, V - 1)

    # Pad vocab / embed dims to lane multiples -> unmasked, lane-dense matmuls
    # and stores.  Padding rows are zeros and never indexed.
    V_pad = _round_up(V, _LANE)
    D_pad = _round_up(D, _LANE)
    table = emb_table
    if (V_pad, D_pad) != (V, D):
        table = jnp.pad(emb_table, ((0, V_pad - V), (0, D_pad - D)))

    # Row tile: multiple of 8, default 512 (amortizes ~0.35us/step overhead);
    # split into >= 2 grid steps when possible so both TensorCores get work.
    n8 = _round_up(N, 8)
    tile = min(_round_up(max(tile_rows, 8), 8), n8)
    if n8 > 8 and _cdiv(n8, tile) < 2:
        tile = _round_up(_cdiv(n8, 2), 8)
    n_tiles = _cdiv(n8, tile)
    n_pad = n_tiles * tile

    idx2d = jnp.pad(flat_idx, (0, n_pad - N)).reshape(n_pad, 1)   # pad with row 0 (valid)

    use_onehot = V_pad <= onehot_max_vocab
    kernel = _onehot_gather_kernel if use_onehot else _take_gather_kernel

    itemsize = table.dtype.itemsize
    table_bytes = V_pad * D_pad * itemsize                 # single copy (untiled VMEM input)
    out_bytes = 2 * tile * D_pad * itemsize                # double-buffered output blocks
    idx_bytes = 2 * tile * _LANE * 4                       # double-buffered index blocks (lane padded)
    onehot_bytes = tile * V_pad * itemsize if use_onehot else 0
    vmem_needed = table_bytes + out_bytes + idx_bytes + onehot_bytes + (2 << 20)
    vmem_cap = _vmem_capacity_bytes()
    # TODO(synk): if vmem_needed exceeds ~75% of capacity (notably v7x's
    # 64 MiB/TC), fall back to an HBM-resident table + manual DMA row gather.
    vmem_limit = int(min(max(32 << 20, vmem_needed), int(0.9 * vmem_cap)))

    grid_spec = pltpu.PrefetchScalarGridSpec(
        num_scalar_prefetch=0,
        grid=(n_tiles,),
        in_specs=[
            # Row ids: pipelined VMEM blocks, one (TILE, 1) column per step.
            pl.BlockSpec((tile, 1), lambda g: (g, 0)),
            # Whole table resident in VMEM, single copy, no per-step DMA.
            pl.BlockSpec(memory_space=pltpu.MemorySpace.VMEM),
        ],
        out_specs=pl.BlockSpec((tile, D_pad), lambda g: (g, 0)),
    )

    out_flat = pl.pallas_call(
        kernel,
        out_shape=jax.ShapeDtypeStruct((n_pad, D_pad), table.dtype),
        grid_spec=grid_spec,
        compiler_params=pltpu.CompilerParams(
            dimension_semantics=("parallel",),
            vmem_limit_bytes=vmem_limit,
        ),
    )(idx2d, table)

    return out_flat[:N, :D].reshape(B, F, D)


if __name__ == "__main__":
    # Module config (small, consistent with the forward pass).
    field_dims = (3, 5, 7, 9)          # num_fields = 4, vocab = sum = 24
    embed_dim = 128
    batch = 64                         # N = 256 rows -> 2 grid steps of 128 rows
    num_fields = len(field_dims)
    vocab = sum(field_dims)

    # offsets = (0, *cumsum(field_dims)[:-1])
    offsets = jnp.asarray(
        (0,) + tuple(int(v) for v in jnp.cumsum(jnp.asarray(field_dims))[:-1]),
        dtype=jnp.int32,
    )

    key = jax.random.PRNGKey(0)
    k_emb, *k_fields = jax.random.split(key, 1 + num_fields)

    # nn.Embedding default init: N(0, 1).
    emb_table = jax.random.normal(k_emb, (vocab, embed_dim), dtype=jnp.float32)

    # Field-local indices, each within its own field cardinality.
    cols = [
        jax.random.randint(k_fields[f], (batch,), 0, field_dims[f], dtype=jnp.int32)
        for f in range(num_fields)
    ]
    x_idx = jnp.stack(cols, axis=1)     # (batch, num_fields) int32

    out = features_embedding(x_idx, offsets, emb_table)
    out = jax.block_until_ready(out)

    # Pure-JAX reference check.
    ref = jnp.take(emb_table, x_idx + offsets[None, :], axis=0)
    assert out.shape == (batch, num_fields, embed_dim)
    assert jnp.allclose(out, ref, rtol=1e-5, atol=1e-6)

    print("KERNEL_OK")
</pallas_src>

<mosaic_0001>
module attributes {stable_mosaic.version = 11 : i64} {
  func.func @_onehot_gather_kernel(%arg0: i32, %arg1: memref<128x1xi32, #tpu.memory_space<vmem>>, %arg2: memref<128x128xf32, #tpu.memory_space<vmem>>, %arg3: memref<128x128xf32, #tpu.memory_space<vmem>>) attributes {dimension_semantics = [#tpu.dimension_semantics<parallel>], iteration_bounds = array<i64: 2>, scalar_prefetch = 0 : i64, scratch_operands = 0 : i64, tpu.core_type = #tpu.core_type<tc>, window_params = [{transform_indices = @transform_0, window_bounds = array<i64: 128, 1>}, {pipeline_mode = #tpu.pipeline_mode<synchronous>, transform_indices = @transform_1, window_bounds = array<i64: 128, 128>}, {transform_indices = @transform_2, window_bounds = array<i64: 128, 128>}]} {
    %c0 = arith.constant 0 : index
    %c0_0 = arith.constant 0 : index
    %0 = vector.load %arg1[%c0, %c0_0] : memref<128x1xi32, #tpu.memory_space<vmem>>, vector<128x1xi32>
    %c0_1 = arith.constant 0 : index
    %c0_2 = arith.constant 0 : index
    %1 = vector.load %arg2[%c0_1, %c0_2] : memref<128x128xf32, #tpu.memory_space<vmem>>, vector<128x128xf32>
    %2 = tpu.iota {dimensions = array<i32: 1>} : vector<128x128xi32>
    %3 = vector.broadcast %0 : vector<128x1xi32> to vector<128x128xi32>
    %4 = arith.cmpi eq, %3, %2 : vector<128x128xi32>
    %cst = arith.constant 1.000000e+00 : f32
    %cst_3 = arith.constant 0.000000e+00 : f32
    %5 = vector.broadcast %cst : f32 to vector<128x128xf32>
    %6 = vector.broadcast %cst_3 : f32 to vector<128x128xf32>
    %7 = arith.select %4, %5, %6 : vector<128x128xi1>, vector<128x128xf32>
    %cst_4 = arith.constant dense<0.000000e+00> : vector<128x128xf32>
    %8 = tpu.matmul %7, %1, %cst_4 {dimension_numbers = #tpu.dot_dimension_numbers<[1], [0], [0], [1], [0, 0, 1, 1], [], []>} : vector<128x128xf32>, vector<128x128xf32>, vector<128x128xf32> -> vector<128x128xf32>
    %c0_5 = arith.constant 0 : index
    %c0_6 = arith.constant 0 : index
    %9 = vector.load %arg3[%c0_5, %c0_6] : memref<128x128xf32, #tpu.memory_space<vmem>>, vector<128x128xf32>
    tpu.vector_store %arg3[%c0_5, %c0_6], %8 {strides = array<i32>} : memref<128x128xf32, #tpu.memory_space<vmem>>, vector<128x128xf32>,
    return
  }
  func.func @transform_0(%arg0: i32) -> (i32, i32) {
    %c0_i32 = arith.constant 0 : i32
    %c0_i32_0 = arith.constant 0 : i32
    return %arg0, %c0_i32 : i32, i32
  }
  func.func @transform_1(%arg0: i32) -> (i32, i32) {
    %c0_i32 = arith.constant 0 : i32
    %c0_i32_0 = arith.constant 0 : i32
    %c0_i32_1 = arith.constant 0 : i32
    return %c0_i32, %c0_i32_0 : i32, i32
  }
  func.func @transform_2(%arg0: i32) -> (i32, i32) {
    %c0_i32 = arith.constant 0 : i32
    %c0_i32_0 = arith.constant 0 : i32
    return %arg0, %c0_i32 : i32, i32
  }
}

</mosaic_0001>

<llo_original>
// kernel: tpu_custom_call.1
$region0: #{tpu_custom_call.1}
  #allocation0 [shape = 'u32[]', space=smem, size = 0x4, offset = 0x4, fixed_abs, tag = 'smem constant byte address 0x4 - core index']
  #allocation1 [shape = 'u32[144,128]{1,0:T(1,128)}', space=vmem, size = 0x12000, scoped, tag = 'internal scratch']
  %s0 = inlined_call_operand.vmem [shape: s32[256,1], index: 0, kind: input, shape index: {}]
  %s1 = inlined_call_operand.vmem [shape: f32[128,128], index: 1, kind: input, shape index: {}]
  %s2 = inlined_call_operand.hbm [shape: f32[256,128], index: 2, kind: output, shape index: {}]
  %s3 = sld [smem:[#allocation0]]
  $region41: #{tpu_custom_call.1} parent=0
    _
  %s5 = ssub.s32 1, %s3
  %s6 = scalar_select 0, %s5, %s3
  $region1: #{tpu_custom_call.1} parent=0
    #allocation2 [shape = 'u8[131072]{0}', space=vmem, size = 0x20000, scoped, tag = 'output window, operand 0']
    #allocation3 [shape = 's32[2]{0}', space=sflag, size = 0x8, scoped, tag = 'scoped memory for tpu_custom_call.1']
    %7 = vsyncpa [#allocation3], 0
    %s8 = scalar_lea.sflag [#allocation3], 1
    %9 = vsyncpa %s8, 0
    loop: start=0, step=1, limit=4
    $region2: #{tpu_custom_call.1} parent=1 // loop_pre_header
      _
    $region3: #{tpu_custom_call.1} parent=1 // loop_header
      %s11 = sphi 0, %s15
      %p12 = scmp.ge.s32.totalorder %s11, 4
      %s21 = sphi 0, %s23
      %s24 = sphi 0, %s21
      %s25 = sphi 0, %s24
      %s41 = sphi 0, %s25
      %s45 = sphi 0, %s45
      %s47 = sphi 0, %s45
      %s48 = sphi 0, %s47
      %s62 = sphi 0, %s48
      %s68 = sphi 0, %s70
      %s71 = sphi 0, %s68
      %s72 = sphi 0, %s71
      %s88 = sphi 0, %s72
    $region4: #{tpu_custom_call.1} parent=1 // loop_header_branch
      %14 = sbr.rel (%p12) target = $region8
    $region5: #{tpu_custom_call.1} parent=1 // loop_body
      %s16 = ssub.s32 %s11, 1
      %s17 = ssub.s32 %s11, 2
      %s18 = sadd.s32 %s11, 1
      %s19 = ssub.s32 %s11, %s18
      %p20 = scmp.eq.s32.totalorder %s19, 0
      %s22 = sadd.s32 %s21, 1
      %s23 = scalar_select %p20, %s21, %s22
      %p26 = pneg %p20
      %p27 = scmp.eq.s32.totalorder %s11, 1
      %p28 = por %p26, %p27
      %p29 = scmp.ne.s32.totalorder %s21, %s24
      %p30 = scmp.eq.s32.totalorder %s11, 0
      %p31 = por %p29, %p30
      %p32 = scmp.ne.s32.totalorder %s21, %s24
      %p33 = scmp.eq.s32.totalorder %s16, 1
      %p34 = por %p32, %p33
      %p35 = scmp.ne.s32.totalorder %s24, %s25
      %p36 = scmp.eq.s32.totalorder %s16, 0
      %p37 = por %p35, %p36
      %p38 = scmp.ne.s32.totalorder %s24, %s25
      %p39 = scmp.eq.s32.totalorder %s17, 1
      %p40 = por %p38, %p39
      %p42 = scmp.ne.s32.totalorder %s25, %s41
      %p43 = scmp.eq.s32.totalorder %s17, 0
      %p44 = por %p42, %p43
      %s46 = sadd.s32 %s45, 1
      %p49 = scmp.eq.s32.totalorder %s11, 1
      %p50 = scmp.ne.s32.totalorder %s45, %s47
      %p51 = scmp.eq.s32.totalorder %s11, 0
      %p52 = por %p50, %p51
      %p53 = scmp.ne.s32.totalorder %s45, %s47
      %p54 = scmp.eq.s32.totalorder %s16, 1
      %p55 = por %p53, %p54
      %p56 = scmp.ne.s32.totalorder %s47, %s48
      %p57 = scmp.eq.s32.totalorder %s16, 0
      %p58 = por %p56, %p57
      %p59 = scmp.ne.s32.totalorder %s47, %s48
      %p60 = scmp.eq.s32.totalorder %s17, 1
      %p61 = por %p59, %p60
      %p63 = scmp.ne.s32.totalorder %s48, %s62
      %p64 = scmp.eq.s32.totalorder %s17, 0
      %p65 = por %p63, %p64
      %s66 = ssub.s32 %s11, %s18
      %p67 = scmp.eq.s32.totalorder %s66, 0
      %s69 = sadd.s32 %s68, 1
      %s70 = scalar_select %p67, %s68, %s69
      %p73 = pneg %p67
      %p74 = scmp.eq.s32.totalorder %s11, 1
      %p75 = por %p73, %p74
      %p76 = scmp.ne.s32.totalorder %s68, %s71
      %p77 = scmp.eq.s32.totalorder %s11, 0
      %p78 = por %p76, %p77
      %p79 = scmp.ne.s32.totalorder %s68, %s71
      %p80 = scmp.eq.s32.totalorder %s16, 1
      %p81 = por %p79, %p80
      %p82 = scmp.ne.s32.totalorder %s71, %s72
      %p83 = scmp.eq.s32.totalorder %s16, 0
      %p84 = por %p82, %p83
      %p85 = scmp.ne.s32.totalorder %s71, %s72
      %p86 = scmp.eq.s32.totalorder %s17, 1
      %p87 = por %p85, %p86
      %p89 = scmp.ne.s32.totalorder %s72, %s88
      %p90 = scmp.eq.s32.totalorder %s17, 0
      %p91 = por %p89, %p90
      %p92 = scmp.le.s32.totalorder 1, %s11
      %p93 = scmp.lt.s32.totalorder %s11, 3
      %p94 = pnand %p92, %p93
      %p95 = pneg %p94
      // Predicated region
      $region9: #{tpu_custom_call.1} parent=5 // pred_check
        _
      $region10: #{tpu_custom_call.1} parent=5 // pred_check_branch
        %97 = sbr.rel (%p94) target = $region12
      $region11: #{tpu_custom_call.1} parent=5 // pred_region
        %s98 = ssub.s32 %s11, 1
        // Predicated region
        $region13: #{tpu_custom_call.1} parent=11 // pred_check
          %p99 = pneg %p58
        $region14: #{tpu_custom_call.1} parent=11 // pred_check_branch
          %101 = sbr.rel (%p99) target = $region16
        $region15: #{tpu_custom_call.1} parent=11 // pred_region
          _
        $region16: #{tpu_custom_call.1} parent=11 // pred_fallthru
          _
      $region12: #{tpu_custom_call.1} parent=5 // pred_fallthru
        _
      %p102 = scmp.lt.s32.totalorder %s11, 2
      // Predicated region
      $region17: #{tpu_custom_call.1} parent=5 // pred_check
        %p103 = pneg %p102
      $region18: #{tpu_custom_call.1} parent=5 // pred_check_branch
        %105 = sbr.rel (%p103) target = $region20
      $region19: #{tpu_custom_call.1} parent=5 // pred_region
        // Predicated region
        $region21: #{tpu_custom_call.1} parent=19 // pred_check
          %p106 = pneg %p31
        $region22: #{tpu_custom_call.1} parent=19 // pred_check_branch
          %108 = sbr.rel (%p106) target = $region24
        $region23: #{tpu_custom_call.1} parent=19 // pred_region
          %s109 = smul.u32 16, %s11
          %p110 = scmp.lt.s32.totalorder %s109, 31
          %s111 = scalar_select %p110, %s109, 31
          %s112 = smul.addr %s111, 8
          %s113 = scalar_lea.vmem %s0, %s112
          %s114 = smul.u32 16, %s11
        $region24: #{tpu_custom_call.1} parent=19 // pred_fallthru
          _
      $region20: #{tpu_custom_call.1} parent=5 // pred_fallthru
        _
      %p115 = scmp.le.s32.totalorder 1, %s11
      %p116 = scmp.lt.s32.totalorder %s11, 3
      %p117 = pnand %p115, %p116
      %p118 = pneg %p117
      // Predicated region
      $region25: #{tpu_custom_call.1} parent=5 // pred_check
        _
      $region26: #{tpu_custom_call.1} parent=5 // pred_check_branch
        %120 = sbr.rel (%p117) target = $region28
      $region27: #{tpu_custom_call.1} parent=5 // pred_region
        %s121 = ssub.s32 %s11, 1
        %s122 = smul.u32 16, %s16
        %p123 = scmp.lt.s32.totalorder %s122, 31
        %s124 = scalar_select %p123, %s122, 31
        %s125 = smul.addr %s124, 8
        %s126 = scalar_lea.vmem %s0, %s125
        %p127 = pneg %p37
        %p128 = pneg %p34
        %p129 = pneg %p58
        %p130 = pneg %p55
        %p131 = pneg %p84
        %p132 = pneg %p81
        %s133 = sand.u32 %s71, 1
        %s134 = scalar_lea.sflag [#allocation3], %s133
        %s135 = sand.u32 %s71, 1
        %s136 = smul.addr %s135, 128
        %s137 = scalar_lea.vmem [#allocation2], %s136
        %s138 = smul.u32 16, %s16
        %p139 = scmp.lt.s32.totalorder %s138, 31
        %s140 = scalar_select %p139, %s138, 31
        %s141 = smul.addr %s140, 8
        %s142 = scalar_lea.vmem %s0, %s141
        %s143 = smul.u32 16, %s16
        %s144 = smul.u32 16, %s16
        %v145 = vld [vmem:[%s142] sm:$0xff]
        %v146 = vld [vmem:[%s142 + $0x8] sm:$0xff]
        %v147 = vld [vmem:[%s142 + $0x10] sm:$0xff]
        %v148 = vld [vmem:[%s142 + $0x18] sm:$0xff]
        %v149 = vld [vmem:[%s142 + $0x20] sm:$0xff]
        %v150 = vld [vmem:[%s142 + $0x28] sm:$0xff]
        %v151 = vld [vmem:[%s142 + $0x30] sm:$0xff]
        %v152 = vld [vmem:[%s142 + $0x38] sm:$0xff]
        %v153 = vld [vmem:[%s142 + $0x40] sm:$0xff]
        %v154 = vld [vmem:[%s142 + $0x48] sm:$0xff]
        %v155 = vld [vmem:[%s142 + $0x50] sm:$0xff]
        %v156 = vld [vmem:[%s142 + $0x58] sm:$0xff]
        %v157 = vld [vmem:[%s142 + $0x60] sm:$0xff]
        %v158 = vld [vmem:[%s142 + $0x68] sm:$0xff]
        %v159 = vld [vmem:[%s142 + $0x70] sm:$0xff]
        %v160 = vld [vmem:[%s142 + $0x78] sm:$0xff]
        %v161 = vld [vmem:[%s1] sm:$0xff]
        %v162 = vld [vmem:[%s1 + $0x8] sm:$0xff]
        %v163 = vld [vmem:[%s1 + $0x10] sm:$0xff]
        %v164 = vld [vmem:[%s1 + $0x18] sm:$0xff]
        %v165 = vld [vmem:[%s1 + $0x20] sm:$0xff]
        %v166 = vld [vmem:[%s1 + $0x28] sm:$0xff]
        %v167 = vld [vmem:[%s1 + $0x30] sm:$0xff]
        %v168 = vld [vmem:[%s1 + $0x38] sm:$0xff]
        %v169 = vld [vmem:[%s1 + $0x40] sm:$0xff]
        %v170 = vld [vmem:[%s1 + $0x48] sm:$0xff]
        %v171 = vld [vmem:[%s1 + $0x50] sm:$0xff]
        %v172 = vld [vmem:[%s1 + $0x58] sm:$0xff]
        %v173 = vld [vmem:[%s1 + $0x60] sm:$0xff]
        %v174 = vld [vmem:[%s1 + $0x68] sm:$0xff]
        %v175 = vld [vmem:[%s1 + $0x70] sm:$0xff]
        %v176 = vld [vmem:[%s1 + $0x78] sm:$0xff]
        %v177 = vlaneseq
        %v178 = vand.u32 %v177, 127
        %179 = vset.pattern.permute.xlu0 0
        %180 = vperm.xlu0 %179, %v145
        %v181 = vpop.permute.xlu0 %180
        %182 = vset.pattern.permute.xlu0 0
        %183 = vperm.xlu0 %182, %v146
        %v184 = vpop.permute.xlu0 %183
        %185 = vset.pattern.permute.xlu0 0
        %186 = vperm.xlu0 %185, %v147
        %v187 = vpop.permute.xlu0 %186
        %188 = vset.pattern.permute.xlu0 0
        %189 = vperm.xlu0 %188, %v148
        %v190 = vpop.permute.xlu0 %189
        %191 = vset.pattern.permute.xlu0 0
        %192 = vperm.xlu0 %191, %v149
        %v193 = vpop.permute.xlu0 %192
        %194 = vset.pattern.permute.xlu0 0
        %195 = vperm.xlu0 %194, %v150
        %v196 = vpop.permute.xlu0 %195
        %197 = vset.pattern.permute.xlu0 0
        %198 = vperm.xlu0 %197, %v151
        %v199 = vpop.permute.xlu0 %198
        %200 = vset.pattern.permute.xlu0 0
        %201 = vperm.xlu0 %200, %v152
        %v202 = vpop.permute.xlu0 %201
        %203 = vset.pattern.permute.xlu0 0
        %204 = vperm.xlu0 %203, %v153
        %v205 = vpop.permute.xlu0 %204
        %206 = vset.pattern.permute.xlu0 0
        %207 = vperm.xlu0 %206, %v154
        %v208 = vpop.permute.xlu0 %207
        %209 = vset.pattern.permute.xlu0 0
        %210 = vperm.xlu0 %209, %v155
        %v211 = vpop.permute.xlu0 %210
        %212 = vset.pattern.permute.xlu0 0
        %213 = vperm.xlu0 %212, %v156
        %v214 = vpop.permute.xlu0 %213
        %215 = vset.pattern.permute.xlu0 0
        %216 = vperm.xlu0 %215, %v157
        %v217 = vpop.permute.xlu0 %216
        %218 = vset.pattern.permute.xlu0 0
        %219 = vperm.xlu0 %218, %v158
        %v220 = vpop.permute.xlu0 %219
        %221 = vset.pattern.permute.xlu0 0
        %222 = vperm.xlu0 %221, %v159
        %v223 = vpop.permute.xlu0 %222
        %224 = vset.pattern.permute.xlu0 0
        %225 = vperm.xlu0 %224, %v160
        %v226 = vpop.permute.xlu0 %225
        %vm227 = vcmp.eq.s32.totalorder %v181, %v178
        %vm228 = vcmp.eq.s32.totalorder %v184, %v178
        %vm229 = vcmp.eq.s32.totalorder %v187, %v178
        %vm230 = vcmp.eq.s32.totalorder %v190, %v178
        %vm231 = vcmp.eq.s32.totalorder %v193, %v178
        %vm232 = vcmp.eq.s32.totalorder %v196, %v178
        %vm233 = vcmp.eq.s32.totalorder %v199, %v178
        %vm234 = vcmp.eq.s32.totalorder %v202, %v178
        %vm235 = vcmp.eq.s32.totalorder %v205, %v178
        %vm236 = vcmp.eq.s32.totalorder %v208, %v178
        %vm237 = vcmp.eq.s32.totalorder %v211, %v178
        %vm238 = vcmp.eq.s32.totalorder %v214, %v178
        %vm239 = vcmp.eq.s32.totalorder %v217, %v178
        %vm240 = vcmp.eq.s32.totalorder %v220, %v178
        %vm241 = vcmp.eq.s32.totalorder %v223, %v178
        %vm242 = vcmp.eq.s32.totalorder %v226, %v178
        %v243 = vsel %vm227, 1.0, 0.0
        %v244 = vsel %vm228, 1.0, 0.0
        %v245 = vsel %vm229, 1.0, 0.0
        %v246 = vsel %vm230, 1.0, 0.0
        %v247 = vsel %vm231, 1.0, 0.0
        %v248 = vsel %vm232, 1.0, 0.0
        %v249 = vsel %vm233, 1.0, 0.0
        %v250 = vsel %vm234, 1.0, 0.0
        %v251 = vsel %vm235, 1.0, 0.0
        %v252 = vsel %vm236, 1.0, 0.0
        %v253 = vsel %vm237, 1.0, 0.0
        %v254 = vsel %vm238, 1.0, 0.0
        %v255 = vsel %vm239, 1.0, 0.0
        %v256 = vsel %vm240, 1.0, 0.0
        %v257 = vsel %vm241, 1.0, 0.0
        %v258 = vsel %vm242, 1.0, 0.0
        %259 = vmatprep.subr.mxu0 0.0
        %260 = vmatpush1.msra.mxu0 %v176
        %261 = vmatprep.subr.mxu0 0.0
        %262 = vmatpush1.msra.mxu0 %v175
        %263 = vmatprep.subr.mxu0 0.0
        %264 = vmatpush1.msra.mxu0 %v174
        %265 = vmatprep.subr.mxu0 0.0
        %266 = vmatpush1.msra.mxu0 %v173
        %267 = vmatprep.subr.mxu0 0.0
        %268 = vmatpush1.msra.mxu0 %v172
        %269 = vmatprep.subr.mxu0 0.0
        %270 = vmatpush1.msra.mxu0 %v171
        %271 = vmatprep.subr.mxu0 0.0
        %272 = vmatpush1.msra.mxu0 %v170
        %273 = vmatprep.subr.mxu0 0.0
        %274 = vmatpush1.msra.mxu0 %v169
        %275 = vmatprep.subr.mxu0 0.0
        %276 = vmatpush1.msra.mxu0 %v168
        %277 = vmatprep.subr.mxu0 0.0
        %278 = vmatpush1.msra.mxu0 %v167
        %279 = vmatprep.subr.mxu0 0.0
        %280 = vmatpush1.msra.mxu0 %v166
        %281 = vmatprep.subr.mxu0 0.0
        %282 = vmatpush1.msra.mxu0 %v165
        %283 = vmatprep.subr.mxu0 0.0
        %284 = vmatpush1.msra.mxu0 %v164
        %285 = vmatprep.subr.mxu0 0.0
        %286 = vmatpush1.msra.mxu0 %v163
        %287 = vmatprep.subr.mxu0 0.0
        %288 = vmatpush1.msra.mxu0 %v162
        %289 = vmatprep.subr.mxu0 0.0
        %290 = vmatpush1.msra.mxu0 %v161
        %291 = vmatprep.subr.mxu0 0.0
        %292 = vmatpush2.msra.mxu0 0.0
        %293 = vmatprep.subr.mxu0 0.0
        %294 = vmatpush2.msra.mxu0 0.0
        %295 = vmatprep.subr.mxu0 0.0
        %296 = vmatpush2.msra.mxu0 0.0
        %297 = vmatprep.subr.mxu0 0.0
        %298 = vmatpush2.msra.mxu0 0.0
        %299 = vmatprep.subr.mxu0 0.0
        %300 = vmatpush2.msra.mxu0 0.0
        %301 = vmatprep.subr.mxu0 0.0
        %302 = vmatpush2.msra.mxu0 0.0
        %303 = vmatprep.subr.mxu0 0.0
        %304 = vmatpush2.msra.mxu0 0.0
        %305 = vmatprep.subr.mxu0 0.0
        %306 = vmatpush2.msra.mxu0 0.0
        %307 = vmatprep.subr.mxu0 0.0
        %308 = vmatpush2.msra.mxu0 0.0
        %309 = vmatprep.subr.mxu0 0.0
        %310 = vmatpush2.msra.mxu0 0.0
        %311 = vmatprep.subr.mxu0 0.0
        %312 = vmatpush2.msra.mxu0 0.0
        %313 = vmatprep.subr.mxu0 0.0
        %314 = vmatpush2.msra.mxu0 0.0
        %315 = vmatprep.subr.mxu0 0.0
        %316 = vmatpush2.msra.mxu0 0.0
        %317 = vmatprep.subr.mxu0 0.0
        %318 = vmatpush2.msra.mxu0 0.0
        %319 = vmatprep.subr.mxu0 0.0
        %320 = vmatpush2.msra.mxu0 0.0
        %321 = vmatprep.subr.mxu0 0.0
        %322 = vmatpush2.msra.mxu0 0.0
        %323 = vmatprep.mubr.f32.mxu0 0.0
        %324 = vmatmul.mubr.f32.gmra.mxu0 %v243
        %v325 = vpop.f32.mrf.mxu0
        %v326 = vadd.f32 0.0, %v325
        %v327 = vpop.f32.mrf.mxu0
        %328 = vmatprep.mubr.f32.mxu0 0.0
        %329 = vmatmul.mubr.f32.gmra.mxu0 %v244
        %v330 = vpop.f32.mrf.mxu0
        %v331 = vadd.f32 0.0, %v330
        %v332 = vpop.f32.mrf.mxu0
        %333 = vmatprep.mubr.f32.mxu0 0.0
        %334 = vmatmul.mubr.f32.gmra.mxu0 %v245
        %v335 = vpop.f32.mrf.mxu0
        %v336 = vadd.f32 0.0, %v335
        %v337 = vpop.f32.mrf.mxu0
        %338 = vmatprep.mubr.f32.mxu0 0.0
        %339 = vmatmul.mubr.f32.gmra.mxu0 %v246
        %v340 = vpop.f32.mrf.mxu0
        %v341 = vadd.f32 0.0, %v340
        %v342 = vpop.f32.mrf.mxu0
        %343 = vmatprep.mubr.f32.mxu0 0.0
        %344 = vmatmul.mubr.f32.gmra.mxu0 %v247
        %v345 = vpop.f32.mrf.mxu0
        %v346 = vadd.f32 0.0, %v345
        %v347 = vpop.f32.mrf.mxu0
        %348 = vmatprep.mubr.f32.mxu0 0.0
        %349 = vmatmul.mubr.f32.gmra.mxu0 %v248
        %v350 = vpop.f32.mrf.mxu0
        %v351 = vadd.f32 0.0, %v350
        %v352 = vpop.f32.mrf.mxu0
        %353 = vmatprep.mubr.f32.mxu0 0.0
        %354 = vmatmul.mubr.f32.gmra.mxu0 %v249
        %v355 = vpop.f32.mrf.mxu0
        %v356 = vadd.f32 0.0, %v355
        %v357 = vpop.f32.mrf.mxu0
        %358 = vmatprep.mubr.f32.mxu0 0.0
        %359 = vmatmul.mubr.f32.gmra.mxu0 %v250
        %v360 = vpop.f32.mrf.mxu0
        %v361 = vadd.f32 0.0, %v360
        %v362 = vpop.f32.mrf.mxu0
        %363 = vmatprep.mubr.f32.mxu0 0.0
        %364 = vmatmul.mubr.f32.gmra.mxu0 %v251
        %v365 = vpop.f32.mrf.mxu0
        %v366 = vadd.f32 0.0, %v365
        %v367 = vpop.f32.mrf.mxu0
        %368 = vmatprep.mubr.f32.mxu0 0.0
        %369 = vmatmul.mubr.f32.gmra.mxu0 %v252
        %v370 = vpop.f32.mrf.mxu0
        %v371 = vadd.f32 0.0, %v370
        %v372 = vpop.f32.mrf.mxu0
        %373 = vmatprep.mubr.f32.mxu0 0.0
        %374 = vmatmul.mubr.f32.gmra.mxu0 %v253
        %v375 = vpop.f32.mrf.mxu0
        %v376 = vadd.f32 0.0, %v375
        %v377 = vpop.f32.mrf.mxu0
        %378 = vmatprep.mubr.f32.mxu0 0.0
        %379 = vmatmul.mubr.f32.gmra.mxu0 %v254
        %v380 = vpop.f32.mrf.mxu0
        %v381 = vadd.f32 0.0, %v380
        %v382 = vpop.f32.mrf.mxu0
        %383 = vmatprep.mubr.f32.mxu0 0.0
        %384 = vmatmul.mubr.f32.gmra.mxu0 %v255
        %v385 = vpop.f32.mrf.mxu0
        %v386 = vadd.f32 0.0, %v385
        %v387 = vpop.f32.mrf.mxu0
        %388 = vmatprep.mubr.f32.mxu0 0.0
        %389 = vmatmul.mubr.f32.gmra.mxu0 %v256
        %v390 = vpop.f32.mrf.mxu0
        %v391 = vadd.f32 0.0, %v390
        %v392 = vpop.f32.mrf.mxu0
        %393 = vmatprep.mubr.f32.mxu0 0.0
        %394 = vmatmul.mubr.f32.gmra.mxu0 %v257
        %v395 = vpop.f32.mrf.mxu0
        %v396 = vadd.f32 0.0, %v395
        %v397 = vpop.f32.mrf.mxu0
        %398 = vmatprep.mubr.f32.mxu0 0.0
        %399 = vmatmul.mubr.f32.gmra.mxu0 %v258
        %v400 = vpop.f32.mrf.mxu0
        %v401 = vadd.f32 0.0, %v400
        %v402 = vpop.f32.mrf.mxu0
        %403 = vdwg.mxu0
        %404 = vst [vmem:[%s137] sm:$0xff] %v326
        %405 = vst [vmem:[%s137 + $0x8] sm:$0xff] %v331
        %406 = vst [vmem:[%s137 + $0x10] sm:$0xff] %v336
        %407 = vst [vmem:[%s137 + $0x18] sm:$0xff] %v341
        %408 = vst [vmem:[%s137 + $0x20] sm:$0xff] %v346
        %409 = vst [vmem:[%s137 + $0x28] sm:$0xff] %v351
        %410 = vst [vmem:[%s137 + $0x30] sm:$0xff] %v356
        %411 = vst [vmem:[%s137 + $0x38] sm:$0xff] %v361
        %412 = vst [vmem:[%s137 + $0x40] sm:$0xff] %v366
        %413 = vst [vmem:[%s137 + $0x48] sm:$0xff] %v371
        %414 = vst [vmem:[%s137 + $0x50] sm:$0xff] %v376
        %415 = vst [vmem:[%s137 + $0x58] sm:$0xff] %v381
        %416 = vst [vmem:[%s137 + $0x60] sm:$0xff] %v386
        %417 = vst [vmem:[%s137 + $0x68] sm:$0xff] %v391
        %418 = vst [vmem:[%s137 + $0x70] sm:$0xff] %v396
        %419 = vst [vmem:[%s137 + $0x78] sm:$0xff] %v401
        %s420 = sand.u32 %s71, 1
        %s421 = scalar_lea.sflag [#allocation3], %s420
        %s422 = sand.u32 %s71, 1
        %s423 = smul.addr %s422, 128
        %s424 = scalar_lea.vmem [#allocation2], %s423
        // Predicated region
        $region29: #{tpu_custom_call.1} parent=27 // pred_check
          %p425 = pneg %p81
        $region30: #{tpu_custom_call.1} parent=27 // pred_check_branch
          %427 = sbr.rel (%p425) target = $region32
        $region31: #{tpu_custom_call.1} parent=27 // pred_region
          %s428 = smul.u32 16, %s16
          %s430 = ssub.s32 2048, 2048
          %431 = vsyncadd %s421, %s430
          %s432 = smul.addr %s428, 128
          %s433 = scalar_lea.hbm %s2, %s432
          %s434 = sshll.u32 %s424, 4
          %s435 = int_to_ptr.vmem [resolvable:$true] %s434
          %440 = dma.vmem_to_hbm [thread:$0]  %s435, 2048, %s433, %s421, 128, 128, 8
        $region32: #{tpu_custom_call.1} parent=27 // pred_fallthru
          _
      $region28: #{tpu_custom_call.1} parent=5 // pred_fallthru
        _
      %p441 = scmp.le.s32.totalorder 2, %s11
      // Predicated region
      $region33: #{tpu_custom_call.1} parent=5 // pred_check
        %p442 = pneg %p441
      $region34: #{tpu_custom_call.1} parent=5 // pred_check_branch
        %444 = sbr.rel (%p442) target = $region36
      $region35: #{tpu_custom_call.1} parent=5 // pred_region
        %s445 = ssub.s32 %s11, 2
        // Predicated region
        $region37: #{tpu_custom_call.1} parent=35 // pred_check
          %p446 = pneg %p87
        $region38: #{tpu_custom_call.1} parent=35 // pred_check_branch
          %448 = sbr.rel (%p446) target = $region40
        $region39: #{tpu_custom_call.1} parent=35 // pred_region
          %s449 = sand.u32 %s72, 1
          %s450 = scalar_lea.sflag [#allocation3], %s449
          %s451 = sand.u32 %s72, 1
          %s452 = smul.addr %s451, 128
          %s453 = scalar_lea.vmem [#allocation2], %s452
          %454 = dma.done %s450, 2048
        $region40: #{tpu_custom_call.1} parent=35 // pred_fallthru
          _
      $region36: #{tpu_custom_call.1} parent=5 // pred_fallthru
        _
    $region6: #{tpu_custom_call.1} parent=1 // loop_footer
      %s15 = sadd.s32 1, %s11
    $region7: #{tpu_custom_call.1} parent=1 // loop_footer_branch
      %10 = sbr.rel target = $region3
    $region8: #{tpu_custom_call.1} parent=1 // loop_exit
      _
    %455 = vsyncpa [#allocation3], 1
    %s456 = scalar_lea.sflag [#allocation3], 1
    %457 = vsyncpa %s456, 1

</llo_original>
